<compile_context>
chip_gen: v7x
topology: tpu7x:2x2x1
jax: 0.10.0
libtpu: 0.0.40
codegen_flags: <defaults>
</compile_context>

<pallas_src>
import functools

import jax
import jax.numpy as jnp
from jax.experimental import pallas as pl
from jax.experimental.pallas import tpu as pltpu


def _shader_bg_color_kernel(colors_ref, pix_ref, out_ref, *, bg_color):
    # colors_ref: (TN, 3, TH, W) float | pix_ref: (TN, TH, W) int32 | out_ref: (TN, 4, TH, W) float
    is_fg = pix_ref[...] >= 0  # foreground pixels (a face was hit)
    for c in range(3):
        out_ref[:, c] = jnp.where(
            is_fg, colors_ref[:, c], jnp.asarray(bg_color[c], dtype=out_ref.dtype))
    # alpha: 1.0 where a face was hit, 0.0 for background
    out_ref[:, 3] = is_fg.astype(out_ref.dtype)


def _shader_bg_image_kernel(colors_ref, pix_ref, bg_ref, out_ref):
    # bg_ref: (3, TH, W) float — per-pixel background image, broadcast over the batch dim.
    is_fg = pix_ref[...] >= 0
    for c in range(3):
        out_ref[:, c] = jnp.where(is_fg, colors_ref[:, c], bg_ref[c])
    # background_image branch of the reference sets alpha to all-ones.
    out_ref[:, 3] = jnp.ones(pix_ref.shape, dtype=out_ref.dtype)


def _pick_tiles(N, H, W, itemsize, has_bg_image):
    """Choose (TN, TH) block sizes.

    Per-step double-buffered VMEM ~= 2 * [(3 + 4 [+3]) * itemsize + 4] * TH * W bytes
    (colors + rgba output [+ bg image] in `itemsize`, int32 pix mask), TN = 1.
    """
    chans = 3 + 4 + (3 if has_bg_image else 0)
    bytes_per_row = 2 * (chans * itemsize + 4) * W
    budget = 8 * 1024 * 1024  # <= ~8 MiB/step: safe headroom on every generation's VMEM limits

    # Tiny problem: one grid step covering everything (amortize per-step overhead).
    if N * H * bytes_per_row <= 2 * 1024 * 1024:
        return N, H

    max_th = min(256, budget // max(bytes_per_row, 1))
    if max_th >= H:
        return 1, H
    max_th = max(8, (max_th // 8) * 8)
    # Prefer a tile that divides H exactly (no ragged tail blocks).
    for th in range(max_th, 7, -8):
        if H % th == 0:
            return 1, th
    return 1, max_th  # ragged tail: elementwise op, Pallas masks out-of-bounds rows


def simple_shader_forward_nchw(pix0, colors_cf, background_color=(1.0, 1.0, 1.0),
                               background_image_cf=None, *, tile_n=None, tile_h=None):
    """Native channel-first shader: no layout copies at all.

    Args:
      pix0:                (N, H, W) int32    — fragments.pix_to_face[..., 0]
      colors_cf:           (N, 3, H, W) float — texels[..., 0, :] channel-first
      background_color:    3-tuple of floats (used when background_image_cf is None)
      background_image_cf: optional (3, H, W) float — per-pixel background, channel-first
    Returns:
      (N, 4, H, W) float — RGBA, channel-first
    """
    N, C, H, W = colors_cf.shape
    assert C == 3, "expected RGB colors"
    assert pix0.shape == (N, H, W)

    dtype = colors_cf.dtype
    itemsize = jnp.dtype(dtype).itemsize
    has_bg_image = background_image_cf is not None
    TN, TH = _pick_tiles(N, H, W, itemsize, has_bg_image)
    if tile_n is not None:
        TN = tile_n
    if tile_h is not None:
        TH = tile_h

    in_specs = [
        pl.BlockSpec((TN, 3, TH, W), lambda n, h: (n, 0, h, 0)),
        pl.BlockSpec((TN, TH, W), lambda n, h: (n, h, 0)),
    ]
    args = [colors_cf, pix0.astype(jnp.int32)]

    if has_bg_image:
        assert background_image_cf.shape == (3, H, W)
        kernel = _shader_bg_image_kernel
        in_specs.append(pl.BlockSpec((3, TH, W), lambda n, h: (0, h, 0)))
        args.append(background_image_cf.astype(dtype))
    else:
        kernel = functools.partial(
            _shader_bg_color_kernel,
            bg_color=tuple(float(c) for c in background_color))

    return pl.pallas_call(
        kernel,
        out_shape=jax.ShapeDtypeStruct((N, 4, H, W), dtype),
        grid=(pl.cdiv(N, TN), pl.cdiv(H, TH)),
        in_specs=in_specs,
        out_specs=pl.BlockSpec((TN, 4, TH, W), lambda n, h: (n, 0, h, 0)),
        compiler_params=pltpu.CompilerParams(
            dimension_semantics=("parallel", "parallel"),
            vmem_limit_bytes=32 * 1024 * 1024,
        ),
    )(*args)


def simple_shader_forward(pix_to_face, texels, background_color=(1.0, 1.0, 1.0),
                          background_image=None):
    """JAX/Pallas equivalent of SimpleShader.forward (texels precomputed), pytorch3d layout.

    Args:
      pix_to_face:      (N, H, W, K) int32
      texels:           (N, H, W, K, 3) float
      background_color: 3-tuple (BlendParams.background_color)
      background_image: optional (H, W, 3) float (BlendParams.background_image)
    Returns:
      images: (N, H, W, 4) float
    """
    N, H, W, K = pix_to_face.shape
    assert texels.shape == (N, H, W, K, 3)

    # Layout glue for the pytorch3d NHWC interface: the K=0 slice fuses with the single
    # NHWC->NCHW transpose into one XLA copy. In a channel-first pipeline call
    # simple_shader_forward_nchw directly and skip these copies entirely.
    colors_cf = jnp.transpose(texels[..., 0, :], (0, 3, 1, 2))  # (N, 3, H, W)
    pix0 = pix_to_face[..., 0].astype(jnp.int32)                # (N, H, W)

    bg_cf = None
    if background_image is not None:
        bg_img = jnp.asarray(background_image)
        assert bg_img.shape == (H, W, 3)
        bg_cf = jnp.transpose(bg_img, (2, 0, 1))                # (3, H, W)

    out_cf = simple_shader_forward_nchw(pix0, colors_cf, background_color, bg_cf)
    return jnp.transpose(out_cf, (0, 2, 3, 1))                  # (N, H, W, 4)


def _reference_forward(pix_to_face, texels, background_color=(1.0, 1.0, 1.0),
                       background_image=None):
    """Plain-JAX reference matching hard_rgb_blend_with_background."""
    is_bg = pix_to_face[..., 0] < 0
    if background_image is not None:
        bg = jnp.asarray(background_image, dtype=texels.dtype)[None]      # (1, H, W, 3)
        pixel_colors = jnp.where(is_bg[..., None], bg, texels[..., 0, :])
        alpha = jnp.ones(pixel_colors.shape[:-1] + (1,), dtype=texels.dtype)
    else:
        bg = jnp.asarray(background_color, dtype=texels.dtype)
        pixel_colors = jnp.where(is_bg[..., None], bg, texels[..., 0, :])
        alpha = (~is_bg).astype(texels.dtype)[..., None]
    return jnp.concatenate([pixel_colors, alpha], axis=-1)


if __name__ == "__main__":
    key = jax.random.PRNGKey(0)
    k1, k2, k3, k4, k5 = jax.random.split(key, 5)

    # Test 1: pytorch3d-layout wrapper, background_color branch (N=2, H=W=16, K=2).
    N, H, W, K = 2, 16, 16, 2
    texels = jax.random.uniform(k1, (N, H, W, K, 3), dtype=jnp.float32)
    pix_to_face = jax.random.randint(k2, (N, H, W, K), minval=-1, maxval=10).astype(jnp.int32)

    images = jax.block_until_ready(simple_shader_forward(pix_to_face, texels))
    ref = _reference_forward(pix_to_face, texels)
    assert images.shape == (N, H, W, 4)
    assert jnp.allclose(images, ref, atol=1e-6), "mismatch vs reference (background_color branch)"

    # Test 2: native channel-first path with forced H tiling (exercises the multi-step grid).
    N2, H2, W2 = 1, 32, 128
    colors_cf = jax.random.uniform(k3, (N2, 3, H2, W2), dtype=jnp.float32)
    pix0 = jax.random.randint(k4, (N2, H2, W2), minval=-1, maxval=5).astype(jnp.int32)

    out_cf = jax.block_until_ready(
        simple_shader_forward_nchw(pix0, colors_cf, tile_n=1, tile_h=8))
    is_bg2 = (pix0 < 0)[:, None]                                          # (N2, 1, H2, W2)
    bgc = jnp.asarray((1.0, 1.0, 1.0), jnp.float32)[None, :, None, None]  # (1, 3, 1, 1)
    ref_cf = jnp.concatenate(
        [jnp.where(is_bg2, bgc, colors_cf), (~is_bg2).astype(jnp.float32)], axis=1)
    assert out_cf.shape == (N2, 4, H2, W2)
    assert jnp.allclose(out_cf, ref_cf, atol=1e-6), "mismatch vs reference (NCHW path)"

    # Test 3: background_image branch (per-pixel background, alpha == 1 everywhere).
    bg_image = jax.random.uniform(k5, (H, W, 3), dtype=jnp.float32)
    images_bg = jax.block_until_ready(
        simple_shader_forward(pix_to_face, texels, background_image=bg_image))
    ref_bg = _reference_forward(pix_to_face, texels, background_image=bg_image)
    assert images_bg.shape == (N, H, W, 4)
    assert jnp.allclose(images_bg, ref_bg, atol=1e-6), "mismatch vs reference (background_image branch)"

    print("KERNEL_OK")
</pallas_src>

<mosaic_0001>
module attributes {stable_mosaic.version = 11 : i64} {
  func.func @_shader_bg_color_kernel(%arg0: i32, %arg1: i32, %arg2: memref<2x3x16x16xf32, #tpu.memory_space<vmem>>, %arg3: memref<2x16x16xi32, #tpu.memory_space<vmem>>, %arg4: memref<2x4x16x16xf32, #tpu.memory_space<vmem>>) attributes {dimension_semantics = [#tpu.dimension_semantics<parallel>, #tpu.dimension_semantics<parallel>], iteration_bounds = array<i64: 1, 1>, scalar_prefetch = 0 : i64, scratch_operands = 0 : i64, tpu.core_type = #tpu.core_type<tc>, window_params = [{transform_indices = @transform_0, window_bounds = array<i64: 2, 3, 16, 16>}, {transform_indices = @transform_1, window_bounds = array<i64: 2, 16, 16>}, {transform_indices = @transform_2, window_bounds = array<i64: 2, 4, 16, 16>}]} {
    %c0 = arith.constant 0 : index
    %c0_0 = arith.constant 0 : index
    %c0_1 = arith.constant 0 : index
    %0 = vector.load %arg3[%c0, %c0_0, %c0_1] : memref<2x16x16xi32, #tpu.memory_space<vmem>>, vector<2x16x16xi32>
    %c0_i32 = arith.constant 0 : i32
    %1 = vector.broadcast %c0_i32 : i32 to vector<2x16x16xi32>
    %2 = arith.cmpi sge, %0, %1 : vector<2x16x16xi32>
    %c0_2 = arith.constant 0 : index
    %c0_3 = arith.constant 0 : index
    %c0_4 = arith.constant 0 : index
    %c0_5 = arith.constant 0 : index
    %3 = vector.load %arg2[%c0_2, %c0_3, %c0_4, %c0_5] : memref<2x3x16x16xf32, #tpu.memory_space<vmem>>, vector<2x1x16x16xf32>
    %4 = vector.shape_cast %3 : vector<2x1x16x16xf32> to vector<2x16x16xf32>
    %cst = arith.constant 1.000000e+00 : f32
    %5 = vector.broadcast %cst : f32 to vector<2x16x16xf32>
    %6 = arith.select %2, %4, %5 : vector<2x16x16xi1>, vector<2x16x16xf32>
    %c0_6 = arith.constant 0 : index
    %c0_7 = arith.constant 0 : index
    %c0_8 = arith.constant 0 : index
    %c0_9 = arith.constant 0 : index
    %7 = vector.load %arg4[%c0_6, %c0_7, %c0_8, %c0_9] : memref<2x4x16x16xf32, #tpu.memory_space<vmem>>, vector<2x1x16x16xf32>
    %8 = vector.shape_cast %7 : vector<2x1x16x16xf32> to vector<2x16x16xf32>
    %9 = vector.shape_cast %6 : vector<2x16x16xf32> to vector<2x1x16x16xf32>
    tpu.vector_store %arg4[%c0_6, %c0_7, %c0_8, %c0_9], %9 {strides = array<i32>} : memref<2x4x16x16xf32, #tpu.memory_space<vmem>>, vector<2x1x16x16xf32>,
    %c0_10 = arith.constant 0 : index
    %c1 = arith.constant 1 : index
    %c0_11 = arith.constant 0 : index
    %c0_12 = arith.constant 0 : index
    %10 = vector.load %arg2[%c0_10, %c1, %c0_11, %c0_12] : memref<2x3x16x16xf32, #tpu.memory_space<vmem>>, vector<2x1x16x16xf32>
    %11 = vector.shape_cast %10 : vector<2x1x16x16xf32> to vector<2x16x16xf32>
    %cst_13 = arith.constant 1.000000e+00 : f32
    %12 = vector.broadcast %cst_13 : f32 to vector<2x16x16xf32>
    %13 = arith.select %2, %11, %12 : vector<2x16x16xi1>, vector<2x16x16xf32>
    %c0_14 = arith.constant 0 : index
    %c1_15 = arith.constant 1 : index
    %c0_16 = arith.constant 0 : index
    %c0_17 = arith.constant 0 : index
    %14 = vector.load %arg4[%c0_14, %c1_15, %c0_16, %c0_17] : memref<2x4x16x16xf32, #tpu.memory_space<vmem>>, vector<2x1x16x16xf32>
    %15 = vector.shape_cast %14 : vector<2x1x16x16xf32> to vector<2x16x16xf32>
    %16 = vector.shape_cast %13 : vector<2x16x16xf32> to vector<2x1x16x16xf32>
    tpu.vector_store %arg4[%c0_14, %c1_15, %c0_16, %c0_17], %16 {strides = array<i32>} : memref<2x4x16x16xf32, #tpu.memory_space<vmem>>, vector<2x1x16x16xf32>,
    %c0_18 = arith.constant 0 : index
    %c2 = arith.constant 2 : index
    %c0_19 = arith.constant 0 : index
    %c0_20 = arith.constant 0 : index
    %17 = vector.load %arg2[%c0_18, %c2, %c0_19, %c0_20] : memref<2x3x16x16xf32, #tpu.memory_space<vmem>>, vector<2x1x16x16xf32>
    %18 = vector.shape_cast %17 : vector<2x1x16x16xf32> to vector<2x16x16xf32>
    %cst_21 = arith.constant 1.000000e+00 : f32
    %19 = vector.broadcast %cst_21 : f32 to vector<2x16x16xf32>
    %20 = arith.select %2, %18, %19 : vector<2x16x16xi1>, vector<2x16x16xf32>
    %c0_22 = arith.constant 0 : index
    %c2_23 = arith.constant 2 : index
    %c0_24 = arith.constant 0 : index
    %c0_25 = arith.constant 0 : index
    %21 = vector.load %arg4[%c0_22, %c2_23, %c0_24, %c0_25] : memref<2x4x16x16xf32, #tpu.memory_space<vmem>>, vector<2x1x16x16xf32>
    %22 = vector.shape_cast %21 : vector<2x1x16x16xf32> to vector<2x16x16xf32>
    %23 = vector.shape_cast %20 : vector<2x16x16xf32> to vector<2x1x16x16xf32>
    tpu.vector_store %arg4[%c0_22, %c2_23, %c0_24, %c0_25], %23 {strides = array<i32>} : memref<2x4x16x16xf32, #tpu.memory_space<vmem>>, vector<2x1x16x16xf32>,
    %24 = arith.extui %2 : vector<2x16x16xi1> to vector<2x16x16xi32>
    %25 = arith.sitofp %24 : vector<2x16x16xi32> to vector<2x16x16xf32>
    %c0_26 = arith.constant 0 : index
    %c3 = arith.constant 3 : index
    %c0_27 = arith.constant 0 : index
    %c0_28 = arith.constant 0 : index
    %26 = vector.load %arg4[%c0_26, %c3, %c0_27, %c0_28] : memref<2x4x16x16xf32, #tpu.memory_space<vmem>>, vector<2x1x16x16xf32>
    %27 = vector.shape_cast %26 : vector<2x1x16x16xf32> to vector<2x16x16xf32>
    %28 = vector.shape_cast %25 : vector<2x16x16xf32> to vector<2x1x16x16xf32>
    tpu.vector_store %arg4[%c0_26, %c3, %c0_27, %c0_28], %28 {strides = array<i32>} : memref<2x4x16x16xf32, #tpu.memory_space<vmem>>, vector<2x1x16x16xf32>,
    return
  }
  func.func @transform_0(%arg0: i32, %arg1: i32) -> (i32, i32, i32, i32) {
    %c0_i32 = arith.constant 0 : i32
    %c0_i32_0 = arith.constant 0 : i32
    %c0_i32_1 = arith.constant 0 : i32
    return %arg0, %c0_i32, %arg1, %c0_i32_0 : i32, i32, i32, i32
  }
  func.func @transform_1(%arg0: i32, %arg1: i32) -> (i32, i32, i32) {
    %c0_i32 = arith.constant 0 : i32
    %c0_i32_0 = arith.constant 0 : i32
    return %arg0, %arg1, %c0_i32 : i32, i32, i32
  }
  func.func @transform_2(%arg0: i32, %arg1: i32) -> (i32, i32, i32, i32) {
    %c0_i32 = arith.constant 0 : i32
    %c0_i32_0 = arith.constant 0 : i32
    %c0_i32_1 = arith.constant 0 : i32
    return %arg0, %c0_i32, %arg1, %c0_i32_0 : i32, i32, i32, i32
  }
}

</mosaic_0001>

<llo_original>
// kernel: tpu_custom_call.1
$region0: #{tpu_custom_call.1}
  #allocation0 [shape = 'u32[]', space=smem, size = 0x4, offset = 0x4, fixed_abs, tag = 'smem constant byte address 0x4 - core index']
  #allocation1 [shape = 'u32[144,128]{1,0:T(1,128)}', space=vmem, size = 0x12000, scoped, tag = 'internal scratch']
  %s0 = inlined_call_operand.hbm [shape: f32[2,3,16,16], index: 0, kind: input, shape index: {}]
  %s1 = inlined_call_operand.hbm [shape: s32[2,16,16], index: 1, kind: input, shape index: {}]
  %s2 = inlined_call_operand.hbm [shape: f32[2,4,16,16], index: 2, kind: output, shape index: {}]
  %s3 = sld [smem:[#allocation0]]
  $region26: #{tpu_custom_call.1} parent=0
    _
  %s5 = ssub.s32 1, %s3
  %s6 = scalar_select 0, %s5, %s3
  $region1: #{tpu_custom_call.1} parent=0
    #allocation2 [shape = 'u8[49152]{0}', space=vmem, size = 0xc000, scoped, tag = 'input window, operand 0, single buffered']
    #allocation3 [shape = 's32[1]{0}', space=sflag, size = 0x4, scoped, tag = 'scoped memory for tpu_custom_call.1']
    #allocation4 [shape = 's32[1]{0}', space=sflag, size = 0x4, scoped, tag = 'scoped memory for tpu_custom_call.1']
    #allocation5 [shape = 'u8[16384]{0}', space=vmem, size = 0x4000, scoped, tag = 'input window, operand 1, single buffered']
    #allocation6 [shape = 's32[1]{0}', space=sflag, size = 0x4, scoped, tag = 'scoped memory for tpu_custom_call.1']
    #allocation7 [shape = 'u8[65536]{0}', space=vmem, size = 0x10000, scoped, tag = 'output window, operand 0, single buffered']
    %7 = vsyncpa [#allocation3], 0
    %8 = vsyncpa [#allocation6], 0
    %9 = vsyncpa [#allocation4], 0
    // Predicated region
    $region2: #{tpu_custom_call.1} parent=1 // pred_check
      _
    $region3: #{tpu_custom_call.1} parent=1 // pred_check_branch
      %11 = sbr.rel (0) target = $region5
    $region4: #{tpu_custom_call.1} parent=1 // pred_region
      %s13 = ssub.s32 1536, 1536
      %14 = vsyncadd [#allocation3], %s13
      %s15 = sshll.u32 [#allocation2], 4
      %s16 = int_to_ptr.vmem [resolvable:$true] %s15
      %21 = dma.hbm_to_vmem [thread:$0]  %s0, 1536, %s16, [#allocation3], 128, 128, 8
    $region5: #{tpu_custom_call.1} parent=1 // pred_fallthru
      _
    // Predicated region
    $region6: #{tpu_custom_call.1} parent=1 // pred_check
      _
    $region7: #{tpu_custom_call.1} parent=1 // pred_check_branch
      %23 = sbr.rel (0) target = $region9
    $region8: #{tpu_custom_call.1} parent=1 // pred_region
      %s25 = ssub.s32 512, 512
      %26 = vsyncadd [#allocation6], %s25
      %s27 = sshll.u32 [#allocation5], 4
      %s28 = int_to_ptr.vmem [resolvable:$true] %s27
      %33 = dma.hbm_to_vmem [thread:$0]  %s1, 512, %s28, [#allocation6], 128, 128, 8
    $region9: #{tpu_custom_call.1} parent=1 // pred_fallthru
      _
    // Predicated region
    $region10: #{tpu_custom_call.1} parent=1 // pred_check
      _
    $region11: #{tpu_custom_call.1} parent=1 // pred_check_branch
      %35 = sbr.rel (0) target = $region13
    $region12: #{tpu_custom_call.1} parent=1 // pred_region
      %36 = dma.done [#allocation3], 1536
    $region13: #{tpu_custom_call.1} parent=1 // pred_fallthru
      _
    // Predicated region
    $region14: #{tpu_custom_call.1} parent=1 // pred_check
      _
    $region15: #{tpu_custom_call.1} parent=1 // pred_check_branch
      %38 = sbr.rel (0) target = $region17
    $region16: #{tpu_custom_call.1} parent=1 // pred_region
      %39 = dma.done [#allocation6], 512
    $region17: #{tpu_custom_call.1} parent=1 // pred_fallthru
      _
    %v40 = vld [vmem:[#allocation5] sm:$0xff]
    %v41 = vld [vmem:[#allocation5 + $0x8] sm:$0xff]
    %v42 = vld [vmem:[#allocation5 + $0x10] sm:$0xff]
    %v43 = vld [vmem:[#allocation5 + $0x18] sm:$0xff]
    %vm44 = vcmp.ge.s32.totalorder %v40, 0
    %vm45 = vcmp.ge.s32.totalorder %v41, 0
    %vm46 = vcmp.ge.s32.totalorder %v42, 0
    %vm47 = vcmp.ge.s32.totalorder %v43, 0
    %v48 = vld [vmem:[#allocation2] sm:$0xff]
    %v49 = vld [vmem:[#allocation2 + $0x8] sm:$0xff]
    %v50 = vld [vmem:[#allocation2 + $0x30] sm:$0xff]
    %v51 = vld [vmem:[#allocation2 + $0x38] sm:$0xff]
    %v52 = vsel %vm44, %v48, 1.0
    %v53 = vsel %vm45, %v49, 1.0
    %v54 = vsel %vm46, %v50, 1.0
    %v55 = vsel %vm47, %v51, 1.0
    %vm56 = vcmask 130048
    %57 = vst.msk [vmem:[#allocation7] sm:$0xff] %vm56, %v52
    %58 = vst.msk [vmem:[#allocation7 + $0x8] sm:$0xff] %vm56, %v53
    %59 = vst.msk [vmem:[#allocation7 + $0x40] sm:$0xff] %vm56, %v54
    %60 = vst.msk [vmem:[#allocation7 + $0x48] sm:$0xff] %vm56, %v55
    %s61 = scalar_lea.vmem [#allocation2], 16
    %v62 = vld [vmem:[%s61] sm:$0xff]
    %v63 = vld [vmem:[%s61 + $0x8] sm:$0xff]
    %v64 = vld [vmem:[%s61 + $0x30] sm:$0xff]
    %v65 = vld [vmem:[%s61 + $0x38] sm:$0xff]
    %v66 = vsel %vm44, %v62, 1.0
    %v67 = vsel %vm45, %v63, 1.0
    %v68 = vsel %vm46, %v64, 1.0
    %v69 = vsel %vm47, %v65, 1.0
    %s70 = scalar_lea.vmem [#allocation7], 16
    %71 = vst.msk [vmem:[%s70] sm:$0xff] %vm56, %v66
    %72 = vst.msk [vmem:[%s70 + $0x8] sm:$0xff] %vm56, %v67
    %73 = vst.msk [vmem:[%s70 + $0x40] sm:$0xff] %vm56, %v68
    %74 = vst.msk [vmem:[%s70 + $0x48] sm:$0xff] %vm56, %v69
    %s75 = scalar_lea.vmem [#allocation2], 32
    %v76 = vld [vmem:[%s75] sm:$0xff]
    %v77 = vld [vmem:[%s75 + $0x8] sm:$0xff]
    %v78 = vld [vmem:[%s75 + $0x30] sm:$0xff]
    %v79 = vld [vmem:[%s75 + $0x38] sm:$0xff]
    %v80 = vsel %vm44, %v76, 1.0
    %v81 = vsel %vm45, %v77, 1.0
    %v82 = vsel %vm46, %v78, 1.0
    %v83 = vsel %vm47, %v79, 1.0
    %s84 = scalar_lea.vmem [#allocation7], 32
    %85 = vst.msk [vmem:[%s84] sm:$0xff] %vm56, %v80
    %86 = vst.msk [vmem:[%s84 + $0x8] sm:$0xff] %vm56, %v81
    %87 = vst.msk [vmem:[%s84 + $0x40] sm:$0xff] %vm56, %v82
    %88 = vst.msk [vmem:[%s84 + $0x48] sm:$0xff] %vm56, %v83
    %v89 = vsel %vm44, 1, 0
    %v90 = vsel %vm45, 1, 0
    %v91 = vsel %vm46, 1, 0
    %v92 = vsel %vm47, 1, 0
    %v93 = vcvt.s32.f32 %v89
    %v94 = vcvt.s32.f32 %v90
    %v95 = vcvt.s32.f32 %v91
    %v96 = vcvt.s32.f32 %v92
    %s97 = scalar_lea.vmem [#allocation7], 48
    %98 = vst.msk [vmem:[%s97] sm:$0xff] %vm56, %v93
    %99 = vst.msk [vmem:[%s97 + $0x8] sm:$0xff] %vm56, %v94
    %100 = vst.msk [vmem:[%s97 + $0x40] sm:$0xff] %vm56, %v95
    %101 = vst.msk [vmem:[%s97 + $0x48] sm:$0xff] %vm56, %v96
    // Predicated region
    $region18: #{tpu_custom_call.1} parent=1 // pred_check
      _
    $region19: #{tpu_custom_call.1} parent=1 // pred_check_branch
      %103 = sbr.rel (0) target = $region21
    $region20: #{tpu_custom_call.1} parent=1 // pred_region
      %s105 = ssub.s32 2048, 2048
      %106 = vsyncadd [#allocation4], %s105
      %s107 = sshll.u32 [#allocation7], 4
      %s108 = int_to_ptr.vmem [resolvable:$true] %s107
      %113 = dma.vmem_to_hbm [thread:$0]  %s108, 2048, %s2, [#allocation4], 128, 128, 8
    $region21: #{tpu_custom_call.1} parent=1 // pred_fallthru
      _
    // Predicated region
    $region22: #{tpu_custom_call.1} parent=1 // pred_check
      _
    $region23: #{tpu_custom_call.1} parent=1 // pred_check_branch
      %115 = sbr.rel (0) target = $region25
    $region24: #{tpu_custom_call.1} parent=1 // pred_region
      %116 = dma.done [#allocation4], 2048
    $region25: #{tpu_custom_call.1} parent=1 // pred_fallthru
      _
    %117 = vsyncpa [#allocation3], 1
    %118 = vsyncpa [#allocation6], 1
    %119 = vsyncpa [#allocation4], 1

</llo_original>
